<compile_context>
chip_gen: v7x
topology: tpu7x:2x2x1
jax: 0.10.0
libtpu: 0.0.40
codegen_flags: <defaults>
</compile_context>

<pallas_src>
import functools

import jax
import jax.numpy as jnp
from jax.experimental import pallas as pl
from jax.experimental.pallas import tpu as pltpu

_MiB = 1024 * 1024


def _elu_plus_one(x):
    # elu(x) + 1 (alpha=1): x + 1 for x > 0, exp(x) otherwise.
    return jnp.where(x > 0, x + 1.0, jnp.exp(x))


def _round_up(x, m):
    return ((x + m - 1) // m) * m


def _cdiv(a, b):
    return (a + b - 1) // b


# ---------------------------------------------------------------------------
# Kernels
# ---------------------------------------------------------------------------

def spectral_ffn_kernel_direct(x_ref, w1_ref, b1_ref, w2_ref, b2_ref, o_ref):
    """f32 output: accumulate fc2 partials directly into the resident o_ref."""
    j = pl.program_id(1)

    h = jnp.dot(x_ref[...], w1_ref[...], preferred_element_type=jnp.float32)
    h = _elu_plus_one(h + b1_ref[...].astype(jnp.float32))
    part = jnp.dot(h.astype(w2_ref.dtype), w2_ref[...],
                   preferred_element_type=jnp.float32)

    @pl.when(j == 0)
    def _():
        o_ref[...] = part

    @pl.when(j > 0)
    def _():
        o_ref[...] += part

    @pl.when(j == pl.num_programs(1) - 1)
    def _():
        o_ref[...] = _elu_plus_one(o_ref[...] + b2_ref[...].astype(jnp.float32))


def spectral_ffn_kernel_scratch(x_ref, w1_ref, b1_ref, w2_ref, b2_ref, o_ref,
                                acc_ref):
    """Non-f32 output: f32 VMEM accumulator, cast once at the last chunk."""
    j = pl.program_id(1)

    h = jnp.dot(x_ref[...], w1_ref[...], preferred_element_type=jnp.float32)
    h = _elu_plus_one(h + b1_ref[...].astype(jnp.float32))
    part = jnp.dot(h.astype(w2_ref.dtype), w2_ref[...],
                   preferred_element_type=jnp.float32)

    @pl.when(j == 0)
    def _():
        acc_ref[...] = part

    @pl.when(j > 0)
    def _():
        acc_ref[...] += part

    @pl.when(j == pl.num_programs(1) - 1)
    def _():
        y = _elu_plus_one(acc_ref[...] + b2_ref[...].astype(jnp.float32))
        o_ref[...] = y.astype(o_ref.dtype)


# ---------------------------------------------------------------------------
# Tile / VMEM budgeting
# ---------------------------------------------------------------------------

def _vmem_capacity_bytes():
    try:
        info = pltpu.get_tpu_info()
        cap = getattr(info, "vmem_capacity_bytes", None)
        if cap:
            return int(cap)
    except Exception:
        pass
    return 64 * _MiB  # conservative fallback (v7x per-TC size)


def _vmem_budget_bytes():
    cap = _vmem_capacity_bytes()
    if cap >= 96 * _MiB:
        # v5e / v6e (128 MiB): large budget so weights stay fully resident.
        budget = min(100 * _MiB, cap - 16 * _MiB)
    else:
        # v7x (64 MiB): leave 12 MiB headroom for compiler temps.
        budget = max(cap - 12 * _MiB, (cap * 3) // 4)
    return cap, budget


def _footprint(tm, th, D, in_isz, out_isz, use_scratch):
    """Modelled VMEM footprint for one grid step (double-buffered pipeline)."""
    x_tiles = 2 * tm * D * in_isz          # x row tiles
    w1_tiles = 2 * D * th * in_isz         # w1 hidden chunks
    w2_tiles = 2 * th * D * in_isz         # w2 hidden chunks
    b_tiles = 2 * 8 * (th + D) * 4         # biases (sublane-padded, f32 bound)
    out_tiles = 2 * tm * D * out_isz       # output row tiles
    acc = tm * D * 4 if use_scratch else 0  # f32 accumulator scratch
    h_f32 = tm * th * 4                    # fc1 intermediate (f32)
    h_cast = tm * th * in_isz if in_isz < 4 else 0  # cast copy fed to MXU
    return (x_tiles + w1_tiles + w2_tiles + b_tiles + out_tiles
            + acc + h_f32 + h_cast)


def _pick_th(tm, D, H, in_isz, out_isz, use_scratch, budget):
    # Prefer th == H: weight block indices never change, so weights are
    # DMA'd exactly once (no re-streaming per row tile).
    if _footprint(tm, H, D, in_isz, out_isz, use_scratch) <= budget:
        return H
    if H % 128 != 0:
        # TODO(synk): add an output-column (third) grid axis for huge,
        # non-128-aligned hidden dims instead of falling back to full H.
        return H
    for k in range(H // 128, 0, -1):
        th = k * 128
        if H % th != 0:
            continue
        if _footprint(tm, th, D, in_isz, out_isz, use_scratch) <= budget:
            return th
    return 128


def _pick_tiles(M, D, H, in_isz, out_isz, use_scratch, tm_req, budget):
    rows8 = _round_up(max(M, 1), 8)
    # >= 2 row blocks when there is enough work: feeds both v7x TensorCores
    # and is harmless on 1-TC parts (weights are not re-read when th == H).
    min_blocks = 2 if rows8 >= 512 else 1
    n_blocks = max(min_blocks, _cdiv(rows8, max(tm_req, 8)))
    while True:
        tm = _round_up(_cdiv(rows8, n_blocks), 8)
        th = _pick_th(tm, D, H, in_isz, out_isz, use_scratch, budget)
        fits = _footprint(tm, th, D, in_isz, out_isz, use_scratch) <= budget
        if fits or tm <= 8:
            return tm, th
        n_blocks *= 2


# ---------------------------------------------------------------------------
# Wrapper
# ---------------------------------------------------------------------------

@functools.partial(jax.jit, static_argnames=("tm", "matmul_dtype"))
def spectral_ffn(x, w1, b1, w2, b2, *, tm=512, matmul_dtype=None):
    """x: (batch, seq, d_model) -> (batch, seq, d_model).

    w1: (d_model, hidden), b1: (hidden,), w2: (hidden, d_model), b2: (d_model,)

    matmul_dtype: optional dtype (e.g. jnp.bfloat16) the matmul operands are
    cast to before the kernel.  Accumulation, bias add and ELU stay f32; the
    output keeps x.dtype.  The f32 matmul path is MXU-rate-limited on all
    generations; pass bf16 when tolerance allows.
    """
    B, S, D = x.shape
    H = w1.shape[1]
    M = B * S
    out_dtype = x.dtype

    mm_dtype = jnp.dtype(matmul_dtype) if matmul_dtype is not None \
        else jnp.dtype(x.dtype)
    in_isz = mm_dtype.itemsize
    out_isz = jnp.dtype(out_dtype).itemsize
    out_is_f32 = jnp.dtype(out_dtype) == jnp.dtype(jnp.float32)
    use_scratch = not out_is_f32

    cap, budget = _vmem_budget_bytes()
    tm_eff, th = _pick_tiles(M, D, H, in_isz, out_isz, use_scratch, tm, budget)

    x2 = x.reshape(M, D).astype(mm_dtype)
    w1c = w1.astype(mm_dtype)
    w2c = w2.astype(mm_dtype)
    b1_2 = b1.reshape(1, H)
    b2_2 = b2.reshape(1, D)

    M_pad = _round_up(M, tm_eff)
    if M_pad != M:
        x2 = jnp.pad(x2, ((0, M_pad - M), (0, 0)))

    row_tiles = M_pad // tm_eff
    h_chunks = max(1, H // th)
    grid = (row_tiles, h_chunks)

    footprint = _footprint(tm_eff, th, D, in_isz, out_isz, use_scratch)
    vmem_limit = int(min(cap, max(footprint + 6 * _MiB, 32 * _MiB)))

    # Weights are re-read once per row tile only when the hidden dim is
    # chunked (block index changes at the row-tile boundary); resident otherwise.
    w_reads = 1 if h_chunks == 1 else row_tiles
    b_isz = jnp.dtype(b1.dtype).itemsize
    cost = pl.CostEstimate(
        flops=4 * M_pad * D * H,                       # 2*M*D*H per matmul, x2
        transcendentals=M_pad * (H + D),               # exp() in both ELUs
        bytes_accessed=int(M_pad * D * in_isz
                           + w_reads * 2 * D * H * in_isz
                           + (H + D) * b_isz
                           + M_pad * D * out_isz),
    )

    in_specs = [
        pl.BlockSpec((tm_eff, D), lambda i, j: (i, 0)),   # x row tile
        pl.BlockSpec((D, th), lambda i, j: (0, j)),       # w1 hidden chunk
        pl.BlockSpec((1, th), lambda i, j: (0, j)),       # b1 hidden chunk
        pl.BlockSpec((th, D), lambda i, j: (j, 0)),       # w2 hidden chunk
        pl.BlockSpec((1, D), lambda i, j: (0, 0)),        # b2
    ]
    out_spec = pl.BlockSpec((tm_eff, D), lambda i, j: (i, 0))

    if out_is_f32:
        kernel = spectral_ffn_kernel_direct
        scratch = []
    else:
        kernel = spectral_ffn_kernel_scratch
        scratch = [pltpu.VMEM((tm_eff, D), jnp.float32)]

    out = pl.pallas_call(
        kernel,
        out_shape=jax.ShapeDtypeStruct((M_pad, D), out_dtype),
        grid_spec=pltpu.PrefetchScalarGridSpec(
            num_scalar_prefetch=0,
            grid=grid,
            in_specs=in_specs,
            out_specs=out_spec,
            scratch_shapes=scratch,
        ),
        compiler_params=pltpu.CompilerParams(
            dimension_semantics=("parallel", "arbitrary"),
            vmem_limit_bytes=vmem_limit,
        ),
        cost_estimate=cost,
    )(x2, w1c, b1_2, w2c, b2_2)

    return out[:M].reshape(B, S, D)


def spectral_ffn_ref(x, w1, b1, w2, b2):
    h = jnp.dot(x, w1) + b1
    h = jax.nn.elu(h) + 1.0
    y = jnp.dot(h, w2) + b2
    y = jax.nn.elu(y) + 1.0
    return y


if __name__ == "__main__":
    key = jax.random.PRNGKey(0)
    batch, seq, d_model, expansion = 2, 8, 128, 4
    hidden = d_model * expansion

    k_x, k_w1, k_b1, k_w2, k_b2 = jax.random.split(key, 5)
    x = jax.random.normal(k_x, (batch, seq, d_model), dtype=jnp.float32)
    lim1 = 1.0 / (d_model ** 0.5)
    lim2 = 1.0 / (hidden ** 0.5)
    w1 = jax.random.uniform(k_w1, (d_model, hidden), minval=-lim1, maxval=lim1,
                            dtype=jnp.float32)
    b1 = jax.random.uniform(k_b1, (hidden,), minval=-lim1, maxval=lim1,
                            dtype=jnp.float32)
    w2 = jax.random.uniform(k_w2, (hidden, d_model), minval=-lim2, maxval=lim2,
                            dtype=jnp.float32)
    b2 = jax.random.uniform(k_b2, (d_model,), minval=-lim2, maxval=lim2,
                            dtype=jnp.float32)

    # 1) f32 path (direct accumulation into o_ref, tight tolerance).
    out = spectral_ffn(x, w1, b1, w2, b2)
    out = jax.block_until_ready(out)
    ref = spectral_ffn_ref(x, w1, b1, w2, b2)
    assert out.shape == (batch, seq, d_model)
    assert jnp.allclose(out, ref, atol=1e-5, rtol=1e-5), \
        float(jnp.max(jnp.abs(out - ref)))

    # 2) f32 inputs with bf16 MXU matmuls (wrapper cast, f32 accumulation).
    out_mm = spectral_ffn(x, w1, b1, w2, b2, matmul_dtype=jnp.bfloat16)
    out_mm = jax.block_until_ready(out_mm)
    assert jnp.allclose(out_mm, ref, atol=0.1, rtol=0.1)

    # 3) bf16 end-to-end (f32 accumulator scratch, bf16 store).
    out_bf16 = spectral_ffn(
        x.astype(jnp.bfloat16),
        w1.astype(jnp.bfloat16), b1.astype(jnp.bfloat16),
        w2.astype(jnp.bfloat16), b2.astype(jnp.bfloat16),
    )
    out_bf16 = jax.block_until_ready(out_bf16)
    assert jnp.allclose(out_bf16.astype(jnp.float32), ref, atol=0.1, rtol=0.1)

    # 4) Larger row count: exercises >= 2 row blocks ("parallel" axis) and
    #    the padding-minimizing tile selection.
    xb = jax.random.normal(jax.random.PRNGKey(1), (4, 160, d_model),
                           dtype=jnp.float32)
    out_big = spectral_ffn(xb, w1, b1, w2, b2)
    out_big = jax.block_until_ready(out_big)
    ref_big = spectral_ffn_ref(xb, w1, b1, w2, b2)
    assert jnp.allclose(out_big, ref_big, atol=1e-5, rtol=1e-5)

    print("KERNEL_OK")
</pallas_src>

<mosaic_0001>
module attributes {stable_mosaic.version = 11 : i64} {
  func.func @spectral_ffn_kernel_direct(%arg0: i32, %arg1: i32, %arg2: memref<16x128xf32, #tpu.memory_space<vmem>>, %arg3: memref<128x512xf32, #tpu.memory_space<vmem>>, %arg4: memref<1x512xf32, #tpu.memory_space<vmem>>, %arg5: memref<512x128xf32, #tpu.memory_space<vmem>>, %arg6: memref<1x128xf32, #tpu.memory_space<vmem>>, %arg7: memref<16x128xf32, #tpu.memory_space<vmem>>) attributes {dimension_semantics = [#tpu.dimension_semantics<parallel>, #tpu.dimension_semantics<arbitrary>], iteration_bounds = array<i64: 1, 1>, scalar_prefetch = 0 : i64, scratch_operands = 0 : i64, tpu.core_type = #tpu.core_type<tc>, window_params = [{transform_indices = @transform_0, window_bounds = array<i64: 16, 128>}, {transform_indices = @transform_1, window_bounds = array<i64: 128, 512>}, {transform_indices = @transform_2, window_bounds = array<i64: 1, 512>}, {transform_indices = @transform_3, window_bounds = array<i64: 512, 128>}, {pipeline_mode = #tpu.pipeline_mode<synchronous>, transform_indices = @transform_4, window_bounds = array<i64: 1, 128>}, {transform_indices = @transform_5, window_bounds = array<i64: 16, 128>}]} {
    %c0 = arith.constant 0 : index
    %c0_0 = arith.constant 0 : index
    %0 = vector.load %arg2[%c0, %c0_0] : memref<16x128xf32, #tpu.memory_space<vmem>>, vector<16x128xf32>
    %c0_1 = arith.constant 0 : index
    %c0_2 = arith.constant 0 : index
    %1 = vector.load %arg3[%c0_1, %c0_2] : memref<128x512xf32, #tpu.memory_space<vmem>>, vector<128x512xf32>
    %cst = arith.constant dense<0.000000e+00> : vector<16x512xf32>
    %2 = tpu.matmul %0, %1, %cst {dimension_numbers = #tpu.dot_dimension_numbers<[1], [0], [0], [1], [0, 0, 1, 1], [], []>} : vector<16x128xf32>, vector<128x512xf32>, vector<16x512xf32> -> vector<16x512xf32>
    %c0_3 = arith.constant 0 : index
    %c0_4 = arith.constant 0 : index
    %3 = vector.load %arg4[%c0_3, %c0_4] : memref<1x512xf32, #tpu.memory_space<vmem>>, vector<1x512xf32>
    %4 = vector.broadcast %3 : vector<1x512xf32> to vector<16x512xf32>
    %5 = arith.addf %2, %4 : vector<16x512xf32>
    %cst_5 = arith.constant 0.000000e+00 : f32
    %6 = vector.broadcast %cst_5 : f32 to vector<16x512xf32>
    %7 = arith.cmpf ogt, %5, %6 : vector<16x512xf32>
    %cst_6 = arith.constant 1.000000e+00 : f32
    %8 = vector.broadcast %cst_6 : f32 to vector<16x512xf32>
    %9 = arith.addf %5, %8 : vector<16x512xf32>
    %10 = math.exp %5 : vector<16x512xf32>
    %11 = arith.select %7, %9, %10 : vector<16x512xi1>, vector<16x512xf32>
    %c0_7 = arith.constant 0 : index
    %c0_8 = arith.constant 0 : index
    %12 = vector.load %arg5[%c0_7, %c0_8] : memref<512x128xf32, #tpu.memory_space<vmem>>, vector<512x128xf32>
    %cst_9 = arith.constant dense<0.000000e+00> : vector<16x128xf32>
    %13 = tpu.matmul %11, %12, %cst_9 {dimension_numbers = #tpu.dot_dimension_numbers<[1], [0], [0], [1], [0, 0, 1, 1], [], []>} : vector<16x512xf32>, vector<512x128xf32>, vector<16x128xf32> -> vector<16x128xf32>
    %c0_i32 = arith.constant 0 : i32
    %14 = arith.cmpi eq, %arg1, %c0_i32 : i32
    %15 = arith.extui %14 : i1 to i32
    %c0_i32_10 = arith.constant 0 : i32
    %16 = arith.cmpi ne, %15, %c0_i32_10 : i32
    scf.if %16 {
      %c0_15 = arith.constant 0 : index
      %c0_16 = arith.constant 0 : index
      %23 = vector.load %arg7[%c0_15, %c0_16] : memref<16x128xf32, #tpu.memory_space<vmem>>, vector<16x128xf32>
      tpu.vector_store %arg7[%c0_15, %c0_16], %13 {strides = array<i32>} : memref<16x128xf32, #tpu.memory_space<vmem>>, vector<16x128xf32>,
    } else {
    }
    %c0_i32_11 = arith.constant 0 : i32
    %17 = arith.cmpi sgt, %arg1, %c0_i32_11 : i32
    %18 = arith.extui %17 : i1 to i32
    %c0_i32_12 = arith.constant 0 : i32
    %19 = arith.cmpi ne, %18, %c0_i32_12 : i32
    scf.if %19 {
      %c0_15 = arith.constant 0 : index
      %c0_16 = arith.constant 0 : index
      %23 = vector.load %arg7[%c0_15, %c0_16] : memref<16x128xf32, #tpu.memory_space<vmem>>, vector<16x128xf32>
      %24 = arith.addf %23, %13 : vector<16x128xf32>
      %c0_17 = arith.constant 0 : index
      %c0_18 = arith.constant 0 : index
      %25 = vector.load %arg7[%c0_17, %c0_18] : memref<16x128xf32, #tpu.memory_space<vmem>>, vector<16x128xf32>
      tpu.vector_store %arg7[%c0_17, %c0_18], %24 {strides = array<i32>} : memref<16x128xf32, #tpu.memory_space<vmem>>, vector<16x128xf32>,
    } else {
    }
    %c0_i32_13 = arith.constant 0 : i32
    %20 = arith.cmpi eq, %arg1, %c0_i32_13 : i32
    %21 = arith.extui %20 : i1 to i32
    %c0_i32_14 = arith.constant 0 : i32
    %22 = arith.cmpi ne, %21, %c0_i32_14 : i32
    scf.if %22 {
      %c0_15 = arith.constant 0 : index
      %c0_16 = arith.constant 0 : index
      %23 = vector.load %arg7[%c0_15, %c0_16] : memref<16x128xf32, #tpu.memory_space<vmem>>, vector<16x128xf32>
      %c0_17 = arith.constant 0 : index
      %c0_18 = arith.constant 0 : index
      %24 = vector.load %arg6[%c0_17, %c0_18] : memref<1x128xf32, #tpu.memory_space<vmem>>, vector<1x128xf32>
      %25 = vector.broadcast %24 : vector<1x128xf32> to vector<16x128xf32>
      %26 = arith.addf %23, %25 : vector<16x128xf32>
      %cst_19 = arith.constant 0.000000e+00 : f32
      %27 = vector.broadcast %cst_19 : f32 to vector<16x128xf32>
      %28 = arith.cmpf ogt, %26, %27 : vector<16x128xf32>
      %cst_20 = arith.constant 1.000000e+00 : f32
      %29 = vector.broadcast %cst_20 : f32 to vector<16x128xf32>
      %30 = arith.addf %26, %29 : vector<16x128xf32>
      %31 = math.exp %26 : vector<16x128xf32>
      %32 = arith.select %28, %30, %31 : vector<16x128xi1>, vector<16x128xf32>
      %c0_21 = arith.constant 0 : index
      %c0_22 = arith.constant 0 : index
      %33 = vector.load %arg7[%c0_21, %c0_22] : memref<16x128xf32, #tpu.memory_space<vmem>>, vector<16x128xf32>
      tpu.vector_store %arg7[%c0_21, %c0_22], %32 {strides = array<i32>} : memref<16x128xf32, #tpu.memory_space<vmem>>, vector<16x128xf32>,
    } else {
    }
    return
  }
  func.func @transform_0(%arg0: i32, %arg1: i32) -> (i32, i32) {
    %c0_i32 = arith.constant 0 : i32
    %c0_i32_0 = arith.constant 0 : i32
    return %arg0, %c0_i32 : i32, i32
  }
  func.func @transform_1(%arg0: i32, %arg1: i32) -> (i32, i32) {
    %c0_i32 = arith.constant 0 : i32
    %c0_i32_0 = arith.constant 0 : i32
    return %c0_i32, %arg1 : i32, i32
  }
  func.func @transform_2(%arg0: i32, %arg1: i32) -> (i32, i32) {
    %c0_i32 = arith.constant 0 : i32
    %c0_i32_0 = arith.constant 0 : i32
    return %c0_i32, %arg1 : i32, i32
  }
  func.func @transform_3(%arg0: i32, %arg1: i32) -> (i32, i32) {
    %c0_i32 = arith.constant 0 : i32
    %c0_i32_0 = arith.constant 0 : i32
    return %arg1, %c0_i32 : i32, i32
  }
  func.func @transform_4(%arg0: i32, %arg1: i32) -> (i32, i32) {
    %c0_i32 = arith.constant 0 : i32
    %c0_i32_0 = arith.constant 0 : i32
    %c0_i32_1 = arith.constant 0 : i32
    return %c0_i32, %c0_i32_0 : i32, i32
  }
  func.func @transform_5(%arg0: i32, %arg1: i32) -> (i32, i32) {
    %c0_i32 = arith.constant 0 : i32
    %c0_i32_0 = arith.constant 0 : i32
    return %arg0, %c0_i32 : i32, i32
  }
}

</mosaic_0001>

<llo_original>
// kernel: spectral_ffn.1
$region0: #{spectral_ffn.1}
  #allocation0 [shape = 'u32[]', space=smem, size = 0x4, offset = 0x4, fixed_abs, tag = 'smem constant byte address 0x4 - core index']
  #allocation1 [shape = 'u32[144,128]{1,0:T(1,128)}', space=vmem, size = 0x12000, scoped, tag = 'internal scratch']
  %s0 = inlined_call_operand.hbm [shape: f32[16,128], index: 0, kind: input, shape index: {}]
  %s1 = inlined_call_operand.hbm [shape: f32[128,512], index: 1, kind: input, shape index: {}]
  %s2 = inlined_call_operand.vmem [shape: f32[1,512], index: 2, kind: input, shape index: {}]
  %s3 = inlined_call_operand.hbm [shape: f32[512,128], index: 3, kind: input, shape index: {}]
  %s4 = inlined_call_operand.vmem [shape: f32[1,128], index: 4, kind: input, shape index: {}]
  %s5 = inlined_call_operand.hbm [shape: f32[16,128], index: 5, kind: output, shape index: {}]
  %s6 = sld [smem:[#allocation0]]
  $region54: #{spectral_ffn.1} parent=0
    _
  %s8 = ssub.s32 1, %s6
  %s9 = scalar_select 0, %s8, %s6
  $region1: #{spectral_ffn.1} parent=0
    #allocation2 [shape = 'u8[8192]{0}', space=vmem, size = 0x2000, scoped, tag = 'input window, operand 0, single buffered']
    #allocation3 [shape = 's32[1]{0}', space=sflag, size = 0x4, scoped, tag = 'scoped memory for spectral_ffn.1']
    #allocation4 [shape = 's32[1]{0}', space=sflag, size = 0x4, scoped, tag = 'scoped memory for spectral_ffn.1']
    #allocation5 [shape = 'u8[262144]{0}', space=vmem, size = 0x40000, scoped, tag = 'input window, operand 1, single buffered']
    #allocation6 [shape = 's32[1]{0}', space=sflag, size = 0x4, scoped, tag = 'scoped memory for spectral_ffn.1']
    #allocation7 [shape = 'u8[262144]{0}', space=vmem, size = 0x40000, scoped, tag = 'input window, operand 3, single buffered']
    #allocation8 [shape = 'u8[8192]{0}', space=vmem, size = 0x2000, scoped, tag = 'output window, operand 0, single buffered']
    %10 = vsyncpa [#allocation3], 0
    %11 = vsyncpa [#allocation6], 0
    %12 = vsyncpa [#allocation4], 0
    // Predicated region
    $region2: #{spectral_ffn.1} parent=1 // pred_check
      _
    $region3: #{spectral_ffn.1} parent=1 // pred_check_branch
      %14 = sbr.rel (0) target = $region5
    $region4: #{spectral_ffn.1} parent=1 // pred_region
      %s16 = ssub.s32 256, 256
      %17 = vsyncadd [#allocation3], %s16
      %s18 = sshll.u32 [#allocation2], 4
      %s19 = int_to_ptr.vmem [resolvable:$true] %s18
      %24 = dma.hbm_to_vmem [thread:$0]  %s0, 256, %s19, [#allocation3], 128, 128, 8
    $region5: #{spectral_ffn.1} parent=1 // pred_fallthru
      _
    // Predicated region
    $region6: #{spectral_ffn.1} parent=1 // pred_check
      _
    $region7: #{spectral_ffn.1} parent=1 // pred_check_branch
      %26 = sbr.rel (0) target = $region9
    $region8: #{spectral_ffn.1} parent=1 // pred_region
      %s28 = ssub.s32 8192, 8192
      %29 = vsyncadd [#allocation6], %s28
      %s30 = sshll.u32 [#allocation5], 4
      %s31 = int_to_ptr.vmem [resolvable:$true] %s30
      %36 = dma.hbm_to_vmem [thread:$0]  %s1, 8192, %s31, [#allocation6], 512, 512, 32
    $region9: #{spectral_ffn.1} parent=1 // pred_fallthru
      _
    // Predicated region
    $region10: #{spectral_ffn.1} parent=1 // pred_check
      _
    $region11: #{spectral_ffn.1} parent=1 // pred_check_branch
      %38 = sbr.rel (0) target = $region13
    $region12: #{spectral_ffn.1} parent=1 // pred_region
      _
    $region13: #{spectral_ffn.1} parent=1 // pred_fallthru
      _
    // Predicated region
    $region14: #{spectral_ffn.1} parent=1 // pred_check
      _
    $region15: #{spectral_ffn.1} parent=1 // pred_check_branch
      %40 = sbr.rel (0) target = $region17
    $region16: #{spectral_ffn.1} parent=1 // pred_region
      %s42 = ssub.s32 8192, 8192
      %43 = vsyncadd [#allocation6], %s42
      %s44 = sshll.u32 [#allocation7], 4
      %s45 = int_to_ptr.vmem [resolvable:$true] %s44
      %50 = dma.hbm_to_vmem [thread:$0]  %s3, 8192, %s45, [#allocation6], 128, 128, 8
    $region17: #{spectral_ffn.1} parent=1 // pred_fallthru
      _
    // Predicated region
    $region18: #{spectral_ffn.1} parent=1 // pred_check
      _
    $region19: #{spectral_ffn.1} parent=1 // pred_check_branch
      %52 = sbr.rel (0) target = $region21
    $region20: #{spectral_ffn.1} parent=1 // pred_region
      _
    $region21: #{spectral_ffn.1} parent=1 // pred_fallthru
      _
    // Predicated region
    $region22: #{spectral_ffn.1} parent=1 // pred_check
      _
    $region23: #{spectral_ffn.1} parent=1 // pred_check_branch
      %54 = sbr.rel (0) target = $region25
    $region24: #{spectral_ffn.1} parent=1 // pred_region
      %55 = dma.done [#allocation3], 256
    $region25: #{spectral_ffn.1} parent=1 // pred_fallthru
      _
    // Predicated region
    $region26: #{spectral_ffn.1} parent=1 // pred_check
      _
    $region27: #{spectral_ffn.1} parent=1 // pred_check_branch
      %57 = sbr.rel (0) target = $region29
    $region28: #{spectral_ffn.1} parent=1 // pred_region
      %58 = dma.done [#allocation6], 8192
    $region29: #{spectral_ffn.1} parent=1 // pred_fallthru
      _
    // Predicated region
    $region30: #{spectral_ffn.1} parent=1 // pred_check
      _
    $region31: #{spectral_ffn.1} parent=1 // pred_check_branch
      %60 = sbr.rel (0) target = $region33
    $region32: #{spectral_ffn.1} parent=1 // pred_region
      %61 = dma.done [#allocation6], 8192
    $region33: #{spectral_ffn.1} parent=1 // pred_fallthru
      _
    %v62 = vld [vmem:[#allocation2] sm:$0xff]
    %v63 = vld [vmem:[#allocation2 + $0x8] sm:$0xff]
    %v64 = vld [vmem:[#allocation5] sm:$0xff]
    %v65 = vld [vmem:[#allocation5 + $0x8] sm:$0xff]
    %v66 = vld [vmem:[#allocation5 + $0x10] sm:$0xff]
    %v67 = vld [vmem:[#allocation5 + $0x18] sm:$0xff]
    %v68 = vld [vmem:[#allocation5 + $0x20] sm:$0xff]
    %v69 = vld [vmem:[#allocation5 + $0x28] sm:$0xff]
    %v70 = vld [vmem:[#allocation5 + $0x30] sm:$0xff]
    %v71 = vld [vmem:[#allocation5 + $0x38] sm:$0xff]
    %v72 = vld [vmem:[#allocation5 + $0x40] sm:$0xff]
    %v73 = vld [vmem:[#allocation5 + $0x48] sm:$0xff]
    %v74 = vld [vmem:[#allocation5 + $0x50] sm:$0xff]
    %v75 = vld [vmem:[#allocation5 + $0x58] sm:$0xff]
    %v76 = vld [vmem:[#allocation5 + $0x60] sm:$0xff]
    %v77 = vld [vmem:[#allocation5 + $0x68] sm:$0xff]
    %v78 = vld [vmem:[#allocation5 + $0x70] sm:$0xff]
    %v79 = vld [vmem:[#allocation5 + $0x78] sm:$0xff]
    %v80 = vld [vmem:[#allocation5 + $0x80] sm:$0xff]
    %v81 = vld [vmem:[#allocation5 + $0x88] sm:$0xff]
    %v82 = vld [vmem:[#allocation5 + $0x90] sm:$0xff]
    %v83 = vld [vmem:[#allocation5 + $0x98] sm:$0xff]
    %v84 = vld [vmem:[#allocation5 + $0xa0] sm:$0xff]
    %v85 = vld [vmem:[#allocation5 + $0xa8] sm:$0xff]
    %v86 = vld [vmem:[#allocation5 + $0xb0] sm:$0xff]
    %v87 = vld [vmem:[#allocation5 + $0xb8] sm:$0xff]
    %v88 = vld [vmem:[#allocation5 + $0xc0] sm:$0xff]
    %v89 = vld [vmem:[#allocation5 + $0xc8] sm:$0xff]
    %v90 = vld [vmem:[#allocation5 + $0xd0] sm:$0xff]
    %v91 = vld [vmem:[#allocation5 + $0xd8] sm:$0xff]
    %v92 = vld [vmem:[#allocation5 + $0xe0] sm:$0xff]
    %v93 = vld [vmem:[#allocation5 + $0xe8] sm:$0xff]
    %v94 = vld [vmem:[#allocation5 + $0xf0] sm:$0xff]
    %v95 = vld [vmem:[#allocation5 + $0xf8] sm:$0xff]
    %v96 = vld [vmem:[#allocation5 + $0x100] sm:$0xff]
    %v97 = vld [vmem:[#allocation5 + $0x108] sm:$0xff]
    %v98 = vld [vmem:[#allocation5 + $0x110] sm:$0xff]
    %v99 = vld [vmem:[#allocation5 + $0x118] sm:$0xff]
    %v100 = vld [vmem:[#allocation5 + $0x120] sm:$0xff]
    %v101 = vld [vmem:[#allocation5 + $0x128] sm:$0xff]
    %v102 = vld [vmem:[#allocation5 + $0x130] sm:$0xff]
    %v103 = vld [vmem:[#allocation5 + $0x138] sm:$0xff]
    %v104 = vld [vmem:[#allocation5 + $0x140] sm:$0xff]
    %v105 = vld [vmem:[#allocation5 + $0x148] sm:$0xff]
    %v106 = vld [vmem:[#allocation5 + $0x150] sm:$0xff]
    %v107 = vld [vmem:[#allocation5 + $0x158] sm:$0xff]
    %v108 = vld [vmem:[#allocation5 + $0x160] sm:$0xff]
    %v109 = vld [vmem:[#allocation5 + $0x168] sm:$0xff]
    %v110 = vld [vmem:[#allocation5 + $0x170] sm:$0xff]
    %v111 = vld [vmem:[#allocation5 + $0x178] sm:$0xff]
    %v112 = vld [vmem:[#allocation5 + $0x180] sm:$0xff]
    %v113 = vld [vmem:[#allocation5 + $0x188] sm:$0xff]
    %v114 = vld [vmem:[#allocation5 + $0x190] sm:$0xff]
    %v115 = vld [vmem:[#allocation5 + $0x198] sm:$0xff]
    %v116 = vld [vmem:[#allocation5 + $0x1a0] sm:$0xff]
    %v117 = vld [vmem:[#allocation5 + $0x1a8] sm:$0xff]
    %v118 = vld [vmem:[#allocation5 + $0x1b0] sm:$0xff]
    %v119 = vld [vmem:[#allocation5 + $0x1b8] sm:$0xff]
    %v120 = vld [vmem:[#allocation5 + $0x1c0] sm:$0xff]
    %v121 = vld [vmem:[#allocation5 + $0x1c8] sm:$0xff]
    %v122 = vld [vmem:[#allocation5 + $0x1d0] sm:$0xff]
    %v123 = vld [vmem:[#allocation5 + $0x1d8] sm:$0xff]
    %v124 = vld [vmem:[#allocation5 + $0x1e0] sm:$0xff]
    %v125 = vld [vmem:[#allocation5 + $0x1e8] sm:$0xff]
    %v126 = vld [vmem:[#allocation5 + $0x1f0] sm:$0xff]
    %v127 = vld [vmem:[#allocation5 + $0x1f8] sm:$0xff]
    %v128 = vld [vmem:[%s2] sm:$0xf]
    %v130 = vlaneseq
    %v131 = vshrl.u32 %v130, 7
    %v132 = vsub.s32 0, %v131
    %v133 = vrot.slane %v128, %v132
    %v134 = vlaneseq
    %v135 = vshrl.u32 %v134, 7
    %v136 = vsub.s32 1, %v135
    %v137 = vrot.slane %v128, %v136
    %v138 = vlaneseq
    %v139 = vshrl.u32 %v138, 7
    %v140 = vsub.s32 2, %v139
    %v141 = vrot.slane %v128, %v140
    %v142 = vlaneseq
    %v143 = vshrl.u32 %v142, 7
    %v144 = vsub.s32 3, %v143
    %v145 = vrot.slane %v128, %v144
    %150 = vmatprep.subr.mxu0 %v65
    %151 = vmatpush1.msra.mxu0 %v64
    %152 = vmatprep.subr.mxu0 %v69
    %153 = vmatpush1.msra.mxu0 %v68
    %154 = vmatprep.subr.mxu0 %v73
    %155 = vmatpush1.msra.mxu0 %v72
    %156 = vmatprep.subr.mxu0 %v77
    %157 = vmatpush1.msra.mxu0 %v76
    %158 = vmatprep.subr.mxu0 %v81
    %159 = vmatpush1.msra.mxu0 %v80
    %160 = vmatprep.subr.mxu0 %v85
    %161 = vmatpush1.msra.mxu0 %v84
    %162 = vmatprep.subr.mxu0 %v89
    %163 = vmatpush1.msra.mxu0 %v88
    %164 = vmatprep.subr.mxu0 %v93
    %165 = vmatpush1.msra.mxu0 %v92
    %166 = vmatprep.subr.mxu0 %v97
    %167 = vmatpush1.msra.mxu0 %v96
    %168 = vmatprep.subr.mxu0 %v101
    %169 = vmatpush1.msra.mxu0 %v100
    %170 = vmatprep.subr.mxu0 %v105
    %171 = vmatpush1.msra.mxu0 %v104
    %172 = vmatprep.subr.mxu0 %v109
    %173 = vmatpush1.msra.mxu0 %v108
    %174 = vmatprep.subr.mxu0 %v113
    %175 = vmatpush1.msra.mxu0 %v112
    %176 = vmatprep.subr.mxu0 %v117
    %177 = vmatpush1.msra.mxu0 %v116
    %178 = vmatprep.subr.mxu0 %v121
    %179 = vmatpush1.msra.mxu0 %v120
    %180 = vmatprep.subr.mxu0 %v125
    %181 = vmatpush1.msra.mxu0 %v124
    %182 = vmatprep.subr.mxu0 0.0
    %183 = vmatpush1.msra.mxu0 0.0
    %184 = vmatprep.subr.mxu0 0.0
    %185 = vmatpush1.msra.mxu0 0.0
    %186 = vmatprep.subr.mxu0 0.0
    %187 = vmatpush1.msra.mxu0 0.0
    %188 = vmatprep.subr.mxu0 0.0
    %189 = vmatpush1.msra.mxu0 0.0
    %190 = vmatprep.subr.mxu0 0.0
    %191 = vmatpush1.msra.mxu0 0.0
    %192 = vmatprep.subr.mxu0 0.0
    %193 = vmatpush1.msra.mxu0 0.0
    %194 = vmatprep.subr.mxu0 0.0
    %195 = vmatpush1.msra.mxu0 0.0
    %196 = vmatprep.subr.mxu0 0.0
    %197 = vmatpush1.msra.mxu0 0.0
    %198 = vmatprep.subr.mxu0 0.0
    %199 = vmatpush1.msra.mxu0 0.0
    %200 = vmatprep.subr.mxu0 0.0
    %201 = vmatpush1.msra.mxu0 0.0
    %202 = vmatprep.subr.mxu0 0.0
    %203 = vmatpush1.msra.mxu0 0.0
    %204 = vmatprep.subr.mxu0 0.0
    %205 = vmatpush1.msra.mxu0 0.0
    %206 = vmatprep.subr.mxu0 0.0
    %207 = vmatpush1.msra.mxu0 0.0
    %208 = vmatprep.subr.mxu0 0.0
    %209 = vmatpush1.msra.mxu0 0.0
    %210 = vmatprep.subr.mxu0 0.0
    %211 = vmatpush1.msra.mxu0 0.0
    %212 = vmatprep.subr.mxu0 0.0
    %213 = vmatpush1.msra.mxu0 0.0
    %214 = vmatprep.mubr.f32.mxu0 0.0
    %215 = vmatmul.mubr.f32.gmra.mrb[0].mxu0 %v62
    %v216 = vpop.f32.mrb[0].mxu0
    %v217 = vadd.f32 %v133, %v216
    %v218 = vpop.f32.mrb[0].mxu0
    %v219 = vadd.f32 %v137, %v218
    %220 = vmatprep.mubr.f32.mxu0 0.0
    %221 = vmatmul.mubr.f32.gmra.mrb[0].mxu0 %v63
    %v222 = vpop.f32.mrb[0].mxu0
    %v223 = vadd.f32 %v133, %v222
    %v224 = vpop.f32.mrb[0].mxu0
    %v225 = vadd.f32 %v137, %v224
    %226 = vdwg.mxu0
    %227 = vmatprep.subr.mxu0 %v67
    %228 = vmatpush1.msra.mxu0 %v66
    %229 = vmatprep.subr.mxu0 %v71
    %230 = vmatpush1.msra.mxu0 %v70
    %231 = vmatprep.subr.mxu0 %v75
    %232 = vmatpush1.msra.mxu0 %v74
    %233 = vmatprep.subr.mxu0 %v79
    %234 = vmatpush1.msra.mxu0 %v78
    %235 = vmatprep.subr.mxu0 %v83
    %236 = vmatpush1.msra.mxu0 %v82
    %237 = vmatprep.subr.mxu0 %v87
    %238 = vmatpush1.msra.mxu0 %v86
    %239 = vmatprep.subr.mxu0 %v91
    %240 = vmatpush1.msra.mxu0 %v90
    %241 = vmatprep.subr.mxu0 %v95
    %242 = vmatpush1.msra.mxu0 %v94
    %243 = vmatprep.subr.mxu0 %v99
    %244 = vmatpush1.msra.mxu0 %v98
    %245 = vmatprep.subr.mxu0 %v103
    %246 = vmatpush1.msra.mxu0 %v102
    %247 = vmatprep.subr.mxu0 %v107
    %248 = vmatpush1.msra.mxu0 %v106
    %249 = vmatprep.subr.mxu0 %v111
    %250 = vmatpush1.msra.mxu0 %v110
    %251 = vmatprep.subr.mxu0 %v115
    %252 = vmatpush1.msra.mxu0 %v114
    %253 = vmatprep.subr.mxu0 %v119
    %254 = vmatpush1.msra.mxu0 %v118
    %255 = vmatprep.subr.mxu0 %v123
    %256 = vmatpush1.msra.mxu0 %v122
    %257 = vmatprep.subr.mxu0 %v127
    %258 = vmatpush1.msra.mxu0 %v126
    %259 = vmatprep.subr.mxu0 0.0
    %260 = vmatpush1.msra.mxu0 0.0
    %261 = vmatprep.subr.mxu0 0.0
    %262 = vmatpush1.msra.mxu0 0.0
    %263 = vmatprep.subr.mxu0 0.0
    %264 = vmatpush1.msra.mxu0 0.0
    %265 = vmatprep.subr.mxu0 0.0
    %266 = vmatpush1.msra.mxu0 0.0
    %267 = vmatprep.subr.mxu0 0.0
    %268 = vmatpush1.msra.mxu0 0.0
    %269 = vmatprep.subr.mxu0 0.0
    %270 = vmatpush1.msra.mxu0 0.0
    %271 = vmatprep.subr.mxu0 0.0
    %272 = vmatpush1.msra.mxu0 0.0
    %273 = vmatprep.subr.mxu0 0.0
    %274 = vmatpush1.msra.mxu0 0.0
    %275 = vmatprep.subr.mxu0 0.0
    %276 = vmatpush1.msra.mxu0 0.0
    %277 = vmatprep.subr.mxu0 0.0
    %278 = vmatpush1.msra.mxu0 0.0
    %279 = vmatprep.subr.mxu0 0.0
    %280 = vmatpush1.msra.mxu0 0.0
    %281 = vmatprep.subr.mxu0 0.0
    %282 = vmatpush1.msra.mxu0 0.0
    %283 = vmatprep.subr.mxu0 0.0
    %284 = vmatpush1.msra.mxu0 0.0
    %285 = vmatprep.subr.mxu0 0.0
    %286 = vmatpush1.msra.mxu0 0.0
    %287 = vmatprep.subr.mxu0 0.0
    %288 = vmatpush1.msra.mxu0 0.0
    %289 = vmatprep.subr.mxu0 0.0
    %290 = vmatpush1.msra.mxu0 0.0
    %291 = vmatprep.mubr.f32.mxu0 0.0
    %292 = vmatmul.mubr.f32.gmra.mrb[0].mxu0 %v62
    %v293 = vpop.f32.mrb[0].mxu0
    %v294 = vadd.f32 %v141, %v293
    %v295 = vpop.f32.mrb[0].mxu0
    %v296 = vadd.f32 %v145, %v295
    %297 = vmatprep.mubr.f32.mxu0 0.0
    %298 = vmatmul.mubr.f32.gmra.mrb[0].mxu0 %v63
    %v299 = vpop.f32.mrb[0].mxu0
    %v300 = vadd.f32 %v141, %v299
    %v301 = vpop.f32.mrb[0].mxu0
    %v302 = vadd.f32 %v145, %v301
    %303 = vdwg.mxu0
    %vm304 = vcmp.gt.f32.partialorder %v217, 0.0
    %vm305 = vcmp.gt.f32.partialorder %v219, 0.0
    %vm306 = vcmp.gt.f32.partialorder %v294, 0.0
    %vm307 = vcmp.gt.f32.partialorder %v296, 0.0
    %vm308 = vcmp.gt.f32.partialorder %v223, 0.0
    %vm309 = vcmp.gt.f32.partialorder %v225, 0.0
    %vm310 = vcmp.gt.f32.partialorder %v300, 0.0
    %vm311 = vcmp.gt.f32.partialorder %v302, 0.0
    %v312 = vadd.f32 %v217, 1.0
    %v313 = vadd.f32 %v219, 1.0
    %v314 = vadd.f32 %v294, 1.0
    %v315 = vadd.f32 %v296, 1.0
    %v316 = vadd.f32 %v223, 1.0
    %v317 = vadd.f32 %v225, 1.0
    %v318 = vadd.f32 %v300, 1.0
    %v319 = vadd.f32 %v302, 1.0
    %v320 = vmul.f32 %v217, 1.442695
    %v321 = vpow.pop %v320
    %v322 = vmul.f32 %v219, 1.442695
    %v323 = vpow.pop %v322
    %v324 = vmul.f32 %v294, 1.442695
    %v325 = vpow.pop %v324
    %v326 = vmul.f32 %v296, 1.442695
    %v327 = vpow.pop %v326
    %v328 = vmul.f32 %v223, 1.442695
    %v329 = vpow.pop %v328
    %v330 = vmul.f32 %v225, 1.442695
    %v331 = vpow.pop %v330
    %v332 = vmul.f32 %v300, 1.442695
    %v333 = vpow.pop %v332
    %v334 = vmul.f32 %v302, 1.442695
    %v335 = vpow.pop %v334
    %v336 = vsel %vm304, %v312, %v321
    %v337 = vsel %vm305, %v313, %v323
    %v338 = vsel %vm306, %v314, %v325
    %v339 = vsel %vm307, %v315, %v327
    %v340 = vsel %vm308, %v316, %v329
    %v341 = vsel %vm309, %v317, %v331
    %v342 = vsel %vm310, %v318, %v333
    %v343 = vsel %vm311, %v319, %v335
    %v344 = vld [vmem:[#allocation7] sm:$0xff]
    %v345 = vld [vmem:[#allocation7 + $0x8] sm:$0xff]
    %v346 = vld [vmem:[#allocation7 + $0x10] sm:$0xff]
    %v347 = vld [vmem:[#allocation7 + $0x18] sm:$0xff]
    %v348 = vld [vmem:[#allocation7 + $0x20] sm:$0xff]
    %v349 = vld [vmem:[#allocation7 + $0x28] sm:$0xff]
    %v350 = vld [vmem:[#allocation7 + $0x30] sm:$0xff]
    %v351 = vld [vmem:[#allocation7 + $0x38] sm:$0xff]
    %v352 = vld [vmem:[#allocation7 + $0x40] sm:$0xff]
    %v353 = vld [vmem:[#allocation7 + $0x48] sm:$0xff]
    %v354 = vld [vmem:[#allocation7 + $0x50] sm:$0xff]
    %v355 = vld [vmem:[#allocation7 + $0x58] sm:$0xff]
    %v356 = vld [vmem:[#allocation7 + $0x60] sm:$0xff]
    %v357 = vld [vmem:[#allocation7 + $0x68] sm:$0xff]
    %v358 = vld [vmem:[#allocation7 + $0x70] sm:$0xff]
    %v359 = vld [vmem:[#allocation7 + $0x78] sm:$0xff]
    %v360 = vld [vmem:[#allocation7 + $0x80] sm:$0xff]
    %v361 = vld [vmem:[#allocation7 + $0x88] sm:$0xff]
    %v362 = vld [vmem:[#allocation7 + $0x90] sm:$0xff]
    %v363 = vld [vmem:[#allocation7 + $0x98] sm:$0xff]
    %v364 = vld [vmem:[#allocation7 + $0xa0] sm:$0xff]
    %v365 = vld [vmem:[#allocation7 + $0xa8] sm:$0xff]
    %v366 = vld [vmem:[#allocation7 + $0xb0] sm:$0xff]
    %v367 = vld [vmem:[#allocation7 + $0xb8] sm:$0xff]
    %v368 = vld [vmem:[#allocation7 + $0xc0] sm:$0xff]
    %v369 = vld [vmem:[#allocation7 + $0xc8] sm:$0xff]
    %v370 = vld [vmem:[#allocation7 + $0xd0] sm:$0xff]
    %v371 = vld [vmem:[#allocation7 + $0xd8] sm:$0xff]
    %v372 = vld [vmem:[#allocation7 + $0xe0] sm:$0xff]
    %v373 = vld [vmem:[#allocation7 + $0xe8] sm:$0xff]
    %v374 = vld [vmem:[#allocation7 + $0xf0] sm:$0xff]
    %v375 = vld [vmem:[#allocation7 + $0xf8] sm:$0xff]
    %v376 = vld [vmem:[#allocation7 + $0x100] sm:$0xff]
    %v377 = vld [vmem:[#allocation7 + $0x108] sm:$0xff]
    %v378 = vld [vmem:[#allocation7 + $0x110] sm:$0xff]
    %v379 = vld [vmem:[#allocation7 + $0x118] sm:$0xff]
    %v380 = vld [vmem:[#allocation7 + $0x120] sm:$0xff]
    %v381 = vld [vmem:[#allocation7 + $0x128] sm:$0xff]
    %v382 = vld [vmem:[#allocation7 + $0x130] sm:$0xff]
    %v383 = vld [vmem:[#allocation7 + $0x138] sm:$0xff]
    %v384 = vld [vmem:[#allocation7 + $0x140] sm:$0xff]
    %v385 = vld [vmem:[#allocation7 + $0x148] sm:$0xff]
    %v386 = vld [vmem:[#allocation7 + $0x150] sm:$0xff]
    %v387 = vld [vmem:[#allocation7 + $0x158] sm:$0xff]
    %v388 = vld [vmem:[#allocation7 + $0x160] sm:$0xff]
    %v389 = vld [vmem:[#allocation7 + $0x168] sm:$0xff]
    %v390 = vld [vmem:[#allocation7 + $0x170] sm:$0xff]
    %v391 = vld [vmem:[#allocation7 + $0x178] sm:$0xff]
    %v392 = vld [vmem:[#allocation7 + $0x180] sm:$0xff]
    %v393 = vld [vmem:[#allocation7 + $0x188] sm:$0xff]
    %v394 = vld [vmem:[#allocation7 + $0x190] sm:$0xff]
    %v395 = vld [vmem:[#allocation7 + $0x198] sm:$0xff]
    %v396 = vld [vmem:[#allocation7 + $0x1a0] sm:$0xff]
    %v397 = vld [vmem:[#allocation7 + $0x1a8] sm:$0xff]
    %v398 = vld [vmem:[#allocation7 + $0x1b0] sm:$0xff]
    %v399 = vld [vmem:[#allocation7 + $0x1b8] sm:$0xff]
    %v400 = vld [vmem:[#allocation7 + $0x1c0] sm:$0xff]
    %v401 = vld [vmem:[#allocation7 + $0x1c8] sm:$0xff]
    %v402 = vld [vmem:[#allocation7 + $0x1d0] sm:$0xff]
    %v403 = vld [vmem:[#allocation7 + $0x1d8] sm:$0xff]
    %v404 = vld [vmem:[#allocation7 + $0x1e0] sm:$0xff]
    %v405 = vld [vmem:[#allocation7 + $0x1e8] sm:$0xff]
    %v406 = vld [vmem:[#allocation7 + $0x1f0] sm:$0xff]
    %v407 = vld [vmem:[#allocation7 + $0x1f8] sm:$0xff]
    %408 = vmatprep.subr.mxu0 0.0
    %409 = vmatpush1.msra.mxu0 %v344
    %410 = vmatprep.subr.mxu0 0.0
    %411 = vmatpush1.msra.mxu0 %v345
    %412 = vmatprep.subr.mxu0 0.0
    %413 = vmatpush1.msra.mxu0 %v346
    %414 = vmatprep.subr.mxu0 0.0
    %415 = vmatpush1.msra.mxu0 %v347
    %416 = vmatprep.subr.mxu0 0.0
    %417 = vmatpush1.msra.mxu0 %v348
    %418 = vmatprep.subr.mxu0 0.0
    %419 = vmatpush1.msra.mxu0 %v349
    %420 = vmatprep.subr.mxu0 0.0
    %421 = vmatpush1.msra.mxu0 %v350
    %422 = vmatprep.subr.mxu0 0.0
    %423 = vmatpush1.msra.mxu0 %v351
    %424 = vmatprep.subr.mxu0 0.0
    %425 = vmatpush1.msra.mxu0 %v352
    %426 = vmatprep.subr.mxu0 0.0
    %427 = vmatpush1.msra.mxu0 %v353
    %428 = vmatprep.subr.mxu0 0.0
    %429 = vmatpush1.msra.mxu0 %v354
    %430 = vmatprep.subr.mxu0 0.0
    %431 = vmatpush1.msra.mxu0 %v355
    %432 = vmatprep.subr.mxu0 0.0
    %433 = vmatpush1.msra.mxu0 %v356
    %434 = vmatprep.subr.mxu0 0.0
    %435 = vmatpush1.msra.mxu0 %v357
    %436 = vmatprep.subr.mxu0 0.0
    %437 = vmatpush1.msra.mxu0 %v358
    %438 = vmatprep.subr.mxu0 0.0
    %439 = vmatpush1.msra.mxu0 %v359
    %440 = vmatprep.subr.mxu0 0.0
    %441 = vmatpush1.msra.mxu0 %v360
    %442 = vmatprep.subr.mxu0 0.0
    %443 = vmatpush1.msra.mxu0 %v361
    %444 = vmatprep.subr.mxu0 0.0
    %445 = vmatpush1.msra.mxu0 %v362
    %446 = vmatprep.subr.mxu0 0.0
    %447 = vmatpush1.msra.mxu0 %v363
    %448 = vmatprep.subr.mxu0 0.0
    %449 = vmatpush1.msra.mxu0 %v364
    %450 = vmatprep.subr.mxu0 0.0
    %451 = vmatpush1.msra.mxu0 %v365
    %452 = vmatprep.subr.mxu0 0.0
    %453 = vmatpush1.msra.mxu0 %v366
    %454 = vmatprep.subr.mxu0 0.0
    %455 = vmatpush1.msra.mxu0 %v367
    %456 = vmatprep.subr.mxu0 0.0
    %457 = vmatpush1.msra.mxu0 %v368
    %458 = vmatprep.subr.mxu0 0.0
    %459 = vmatpush1.msra.mxu0 %v369
    %460 = vmatprep.subr.mxu0 0.0
    %461 = vmatpush1.msra.mxu0 %v370
    %462 = vmatprep.subr.mxu0 0.0
    %463 = vmatpush1.msra.mxu0 %v371
    %464 = vmatprep.subr.mxu0 0.0
    %465 = vmatpush1.msra.mxu0 %v372
    %466 = vmatprep.subr.mxu0 0.0
    %467 = vmatpush1.msra.mxu0 %v373
    %468 = vmatprep.subr.mxu0 0.0
    %469 = vmatpush1.msra.mxu0 %v374
    %470 = vmatprep.subr.mxu0 0.0
    %471 = vmatpush1.msra.mxu0 %v375
    %472 = vmatprep.mubr.f32.mxu0 %v337
    %473 = vmatmul.mubr.f32.gmra.mrb[0].mxu0 %v336
    %v474 = vpop.f32.mrb[0].mxu0
    %v475 = vadd.f32 0.0, %v474
    %v476 = vpop.f32.mrb[0].mxu0
    %477 = vmatprep.mubr.f32.mxu0 %v341
    %478 = vmatmul.mubr.f32.gmra.mrb[0].mxu0 %v340
    %v479 = vpop.f32.mrb[0].mxu0
    %v480 = vadd.f32 0.0, %v479
    %v481 = vpop.f32.mrb[0].mxu0
    %482 = vdwg.mxu0
    %483 = vmatprep.subr.mxu0 0.0
    %484 = vmatpush1.msra.mxu0 %v376
    %485 = vmatprep.subr.mxu0 0.0
    %486 = vmatpush1.msra.mxu0 %v377
    %487 = vmatprep.subr.mxu0 0.0
    %488 = vmatpush1.msra.mxu0 %v378
    %489 = vmatprep.subr.mxu0 0.0
    %490 = vmatpush1.msra.mxu0 %v379
    %491 = vmatprep.subr.mxu0 0.0
    %492 = vmatpush1.msra.mxu0 %v380
    %493 = vmatprep.subr.mxu0 0.0
    %494 = vmatpush1.msra.mxu0 %v381
    %495 = vmatprep.subr.mxu0 0.0
    %496 = vmatpush1.msra.mxu0 %v382
    %497 = vmatprep.subr.mxu0 0.0
    %498 = vmatpush1.msra.mxu0 %v383
    %499 = vmatprep.subr.mxu0 0.0
    %500 = vmatpush1.msra.mxu0 %v384
    %501 = vmatprep.subr.mxu0 0.0
    %502 = vmatpush1.msra.mxu0 %v385
    %503 = vmatprep.subr.mxu0 0.0
    %504 = vmatpush1.msra.mxu0 %v386
    %505 = vmatprep.subr.mxu0 0.0
    %506 = vmatpush1.msra.mxu0 %v387
    %507 = vmatprep.subr.mxu0 0.0
    %508 = vmatpush1.msra.mxu0 %v388
    %509 = vmatprep.subr.mxu0 0.0
    %510 = vmatpush1.msra.mxu0 %v389
    %511 = vmatprep.subr.mxu0 0.0
    %512 = vmatpush1.msra.mxu0 %v390
    %513 = vmatprep.subr.mxu0 0.0
    %514 = vmatpush1.msra.mxu0 %v391
    %515 = vmatprep.subr.mxu0 0.0
    %516 = vmatpush1.msra.mxu0 %v392
    %517 = vmatprep.subr.mxu0 0.0
    %518 = vmatpush1.msra.mxu0 %v393
    %519 = vmatprep.subr.mxu0 0.0
    %520 = vmatpush1.msra.mxu0 %v394
    %521 = vmatprep.subr.mxu0 0.0
    %522 = vmatpush1.msra.mxu0 %v395
    %523 = vmatprep.subr.mxu0 0.0
    %524 = vmatpush1.msra.mxu0 %v396
    %525 = vmatprep.subr.mxu0 0.0
    %526 = vmatpush1.msra.mxu0 %v397
    %527 = vmatprep.subr.mxu0 0.0
    %528 = vmatpush1.msra.mxu0 %v398
    %529 = vmatprep.subr.mxu0 0.0
    %530 = vmatpush1.msra.mxu0 %v399
    %531 = vmatprep.subr.mxu0 0.0
    %532 = vmatpush1.msra.mxu0 %v400
    %533 = vmatprep.subr.mxu0 0.0
    %534 = vmatpush1.msra.mxu0 %v401
    %535 = vmatprep.subr.mxu0 0.0
    %536 = vmatpush1.msra.mxu0 %v402
    %537 = vmatprep.subr.mxu0 0.0
    %538 = vmatpush1.msra.mxu0 %v403
    %539 = vmatprep.subr.mxu0 0.0
    %540 = vmatpush1.msra.mxu0 %v404
    %541 = vmatprep.subr.mxu0 0.0
    %542 = vmatpush1.msra.mxu0 %v405
    %543 = vmatprep.subr.mxu0 0.0
    %544 = vmatpush1.msra.mxu0 %v406
    %545 = vmatprep.subr.mxu0 0.0
    %546 = vmatpush1.msra.mxu0 %v407
    %547 = vmatprep.mubr.f32.mxu0 %v339
    %548 = vmatmul.mubr.f32.gmra.mrb[0].mxu0 %v338
    %v549 = vpop.f32.mrb[0].mxu0
    %v550 = vadd.f32 %v475, %v549
    %v551 = vpop.f32.mrb[0].mxu0
    %552 = vmatprep.mubr.f32.mxu0 %v343
    %553 = vmatmul.mubr.f32.gmra.mrb[0].mxu0 %v342
    %v554 = vpop.f32.mrb[0].mxu0
    %v555 = vadd.f32 %v480, %v554
    %v556 = vpop.f32.mrb[0].mxu0
    %557 = vdwg.mxu0
    %p558 = scmp.eq.s32.totalorder 0, 0
    // Predicated region
    $region34: #{spectral_ffn.1} parent=1 // pred_check
      %p559 = pneg %p558
    $region35: #{spectral_ffn.1} parent=1 // pred_check_branch
      %561 = sbr.rel (%p559) target = $region37
    $region36: #{spectral_ffn.1} parent=1 // pred_region
      %562 = vst [vmem:[#allocation8] sm:$0xff] %v550
      %563 = vst [vmem:[#allocation8 + $0x8] sm:$0xff] %v555
    $region37: #{spectral_ffn.1} parent=1 // pred_fallthru
      _
    %p564 = scmp.gt.s32.totalorder 0, 0
    // Predicated region
    $region38: #{spectral_ffn.1} parent=1 // pred_check
      %p565 = pneg %p564
    $region39: #{spectral_ffn.1} parent=1 // pred_check_branch
      %567 = sbr.rel (%p565) target = $region41
    $region40: #{spectral_ffn.1} parent=1 // pred_region
      %v568 = vld [vmem:[#allocation8] sm:$0xff]
      %v569 = vld [vmem:[#allocation8 + $0x8] sm:$0xff]
      %v570 = vadd.f32 %v568, %v550
      %v571 = vadd.f32 %v569, %v555
      %572 = vst [vmem:[#allocation8] sm:$0xff] %v570
      %573 = vst [vmem:[#allocation8 + $0x8] sm:$0xff] %v571
    $region41: #{spectral_ffn.1} parent=1 // pred_fallthru
      _
    // Predicated region
    $region42: #{spectral_ffn.1} parent=1 // pred_check
      %p574 = pneg %p558
    $region43: #{spectral_ffn.1} parent=1 // pred_check_branch
      %576 = sbr.rel (%p574) target = $region45
    $region44: #{spectral_ffn.1} parent=1 // pred_region
      %v577 = vld [vmem:[#allocation8] sm:$0xff]
      %v578 = vld [vmem:[#allocation8 + $0x8] sm:$0xff]
      %v579 = vld [vmem:[%s4] sm:$0x1]
      %v581 = vlaneseq
      %v582 = vshrl.u32 %v581, 7
      %v583 = vsub.s32 0, %v582
      %v584 = vrot.slane %v579, %v583
      %v586 = vadd.f32 %v577, %v584
      %v587 = vadd.f32 %v578, %v584
      %vm588 = vcmp.gt.f32.partialorder %v586, 0.0
      %vm589 = vcmp.gt.f32.partialorder %v587, 0.0
      %v590 = vadd.f32 %v586, 1.0
      %v591 = vadd.f32 %v587, 1.0
      %v592 = vmul.f32 %v586, 1.442695
      %v593 = vpow.pop %v592
      %v594 = vmul.f32 %v587, 1.442695
      %v595 = vpow.pop %v594
      %v596 = vsel %vm588, %v590, %v593
      %v597 = vsel %vm589, %v591, %v595
      %598 = vst [vmem:[#allocation8] sm:$0xff] %v596
      %599 = vst [vmem:[#allocation8 + $0x8] sm:$0xff] %v597
    $region45: #{spectral_ffn.1} parent=1 // pred_fallthru
      _
    // Predicated region
    $region46: #{spectral_ffn.1} parent=1 // pred_check
      _
    $region47: #{spectral_ffn.1} parent=1 // pred_check_branch
      %601 = sbr.rel (0) target = $region49
    $region48: #{spectral_ffn.1} parent=1 // pred_region
      %s603 = ssub.s32 256, 256
      %604 = vsyncadd [#allocation4], %s603
      %s605 = sshll.u32 [#allocation8], 4
      %s606 = int_to_ptr.vmem [resolvable:$true] %s605
      %611 = dma.vmem_to_hbm [thread:$0]  %s606, 256, %s5, [#allocation4], 128, 128, 8
    $region49: #{spectral_ffn.1} parent=1 // pred_fallthru
      _
    // Predicated region
    $region50: #{spectral_ffn.1} parent=1 // pred_check
      _
    $region51: #{spectral_ffn.1} parent=1 // pred_check_branch
      %613 = sbr.rel (0) target = $region53
    $region52: #{spectral_ffn.1} parent=1 // pred_region
      %614 = dma.done [#allocation4], 256
    $region53: #{spectral_ffn.1} parent=1 // pred_fallthru
      _
    %615 = vsyncpa [#allocation3], 1
    %616 = vsyncpa [#allocation6], 1
    %617 = vsyncpa [#allocation4], 1

</llo_original>
